<compile_context>
chip_gen: v7x
topology: tpu7x:2x2x1
jax: 0.10.0
libtpu: 0.0.40
codegen_flags: <defaults>
</compile_context>

<pallas_src>
import functools

import jax
import jax.numpy as jnp
from jax.experimental import pallas as pl
from jax.experimental.pallas import tpu as pltpu


def _round_up(x, m):
    return (x + m - 1) // m * m


def _one_graph_attention_kernel(
    z_ref, w1_ref, b1_ref, w2t_ref, out_ref, m_ref, l_ref, *, rows_in_last_tile
):
    i = pl.program_id(0)
    last = pl.num_programs(0) - 1

    @pl.when(i == 0)
    def _():
        m_ref[...] = jnp.full(m_ref.shape, -jnp.inf, m_ref.dtype)
        l_ref[...] = jnp.zeros(l_ref.shape, l_ref.dtype)
        out_ref[...] = jnp.zeros(out_ref.shape, out_ref.dtype)

    z = z_ref[...]                                           # (tn, d), input dtype

    # First Linear + tanh (MXU, f32 accumulation; hidden is lane-padded to 128).
    h = jnp.tanh(
        jnp.dot(z, w1_ref[...], preferred_element_type=jnp.float32) + b1_ref[...]
    )                                                        # (tn, hp) f32

    # Second Linear as VPU multiply + lane reduction (no (tn,H)@(H,1) MXU op).
    # b2 is uniform over rows and cancels in the dim=0 softmax -> dropped.
    s = jnp.sum(h * w2t_ref[...], axis=1, keepdims=True)     # (tn, 1) f32

    def update(s_t, z_t):
        # Online softmax over the node axis; accumulate into the resident
        # (1, d) output block.
        m_old = m_ref[...]                                   # (1, 1)
        m_new = jnp.maximum(m_old, jnp.max(s_t, axis=0, keepdims=True))
        alpha = jnp.exp(m_old - m_new)                       # (1, 1)
        p = jnp.exp(s_t - m_new)                             # (tn, 1); 0 on masked rows
        l_ref[...] = alpha * l_ref[...] + jnp.sum(p, axis=0, keepdims=True)
        out_ref[...] = alpha * out_ref[...] + jnp.sum(p * z_t, axis=0, keepdims=True)
        m_ref[...] = m_new

    if rows_in_last_tile is None:
        # N is a multiple of the tile: every tile is full, no masking anywhere.
        update(s, z)
    else:
        @pl.when(i != last)
        def _():
            update(s, z)                                     # steady state: no masks

        @pl.when(i == last)
        def _():
            # Boundary tile only: rows >= rows_in_last_tile are out-of-bounds
            # garbage.  Mask the logits to -inf (keeps them out of m and l) and
            # zero those z rows (guards the weighted sum against NaN/Inf bits).
            row = jax.lax.broadcasted_iota(jnp.int32, s.shape, 0)
            valid = row < rows_in_last_tile
            update(jnp.where(valid, s, -jnp.inf),
                   jnp.where(valid, z, jnp.zeros_like(z)))

    @pl.when(i == last)
    def _():
        # Exact normalisation (runs exactly once; no approx reciprocal).
        out_ref[...] = out_ref[...] * (1.0 / l_ref[...])


def one_graph_attention(z, w1, b1, w2, b2=None, *, tile_n=None):
    """z: (N, in_size); w1: (in, hid); b1: (hid,); w2: (hid, 1) -> (1, in_size) f32.

    b2 is accepted for interface parity with the PyTorch module but unused:
    a bias that is constant across rows cancels exactly in the dim=0 softmax.
    Output dtype is float32 regardless of z.dtype (pooled embedding).
    """
    del b2
    n, d = z.shape
    hid = w1.shape[1]
    z_bytes = jnp.dtype(z.dtype).itemsize

    # Lane-dense zero padding of the hidden dim.  w1 is packed in z's dtype so
    # the MXU sees matched operands (pass bf16 z to halve HBM traffic on
    # bandwidth-poor generations); bias / w2^T stay f32 (they only touch the
    # f32 post-matmul path).
    hp = _round_up(hid, 128)
    w1p = jnp.zeros((d, hp), z.dtype).at[:, :hid].set(w1.astype(z.dtype))
    b1p = jnp.zeros((1, hp), jnp.float32).at[:, :hid].set(
        b1.reshape(1, hid).astype(jnp.float32))
    w2t = jnp.zeros((1, hp), jnp.float32).at[:, :hid].set(
        w2.reshape(1, hid).astype(jnp.float32))

    # --- Row-tile sizing ------------------------------------------------------
    # Sublane multiple depends on dtype packing (8 f32 / 16 bf16 / 32 int8-fp8).
    sub = {4: 8, 2: 16, 1: 32}.get(z_bytes, 8)
    if tile_n is None:
        # Target ~4 MiB of z per pipeline buffer (amortises the ~0.35 us
        # grid-step overhead and gives the DMA enough length to hide).
        tn = max((4 << 20) // (d * z_bytes), 256)
    else:
        tn = tile_n
    # Cap so double-buffered z + double-buffered weights + output fit a VMEM
    # budget that compiles on every generation (v7x: 64 MiB physical).
    w_bytes = 2 * (d * hp * z_bytes + 2 * hp * 4) + 2 * d * 4
    budget = 44 << 20
    cap = max((budget - w_bytes) // (2 * d * z_bytes), sub)
    tn = int(min(tn, cap, 8192))
    tn = max(_round_up(tn, sub), sub)
    tn = min(tn, _round_up(n, sub))
    grid = (pl.cdiv(n, tn),)

    # Valid rows in the final (possibly partial) tile; None when every tile is
    # full so the kernel emits no masking at all.
    rem = n - (grid[0] - 1) * tn
    rows_in_last_tile = None if rem == tn else rem

    vmem_need = 2 * tn * d * z_bytes + w_bytes + (1 << 15)
    vmem_limit = int(min(max(vmem_need + (8 << 20), 32 << 20), 56 << 20))

    kernel = functools.partial(
        _one_graph_attention_kernel, rows_in_last_tile=rows_in_last_tile)

    return pl.pallas_call(
        kernel,
        out_shape=jax.ShapeDtypeStruct((1, d), jnp.float32),
        grid_spec=pltpu.PrefetchScalarGridSpec(
            num_scalar_prefetch=0,
            grid=grid,
            in_specs=[
                pl.BlockSpec((tn, d), lambda i: (i, 0)),    # z: streamed over N
                pl.BlockSpec((d, hp), lambda i: (0, 0)),    # w1: VMEM-resident
                pl.BlockSpec((1, hp), lambda i: (0, 0)),    # b1: VMEM-resident
                pl.BlockSpec((1, hp), lambda i: (0, 0)),    # w2^T: VMEM-resident
            ],
            out_specs=pl.BlockSpec((1, d), lambda i: (0, 0)),
            scratch_shapes=[
                pltpu.VMEM((1, 1), jnp.float32),            # running max  m
                pltpu.VMEM((1, 1), jnp.float32),            # running sum  l
            ],
        ),
        compiler_params=pltpu.CompilerParams(
            dimension_semantics=("arbitrary",),             # reduction over N tiles
            vmem_limit_bytes=vmem_limit,
        ),
    )(z, w1p, b1p, w2t)


def reference(z, w1, b1, w2, b2):
    h = jnp.tanh(z @ w1 + b1)
    w = h @ w2 + b2
    beta = jax.nn.softmax(w, axis=0)
    return beta.T @ z


if __name__ == "__main__":
    N, IN_SIZE, HIDDEN = 200, 16, 32

    key = jax.random.PRNGKey(0)
    k_z, k_w1, k_b1, k_w2, k_b2 = jax.random.split(key, 5)

    z = jax.random.normal(k_z, (N, IN_SIZE), dtype=jnp.float32)
    lim1 = 1.0 / (IN_SIZE ** 0.5)
    w1 = jax.random.uniform(k_w1, (IN_SIZE, HIDDEN), jnp.float32, -lim1, lim1)
    b1 = jax.random.uniform(k_b1, (HIDDEN,), jnp.float32, -lim1, lim1)
    lim2 = 1.0 / (HIDDEN ** 0.5)
    w2 = jax.random.uniform(k_w2, (HIDDEN, 1), jnp.float32, -lim2, lim2)
    b2 = jax.random.uniform(k_b2, (1, 1), jnp.float32, -lim2, lim2)

    ref = reference(z, w1, b1, w2, b2)

    # 1) Auto tile size (N=200 fits a single block -> no masking path).
    out = jax.block_until_ready(one_graph_attention(z, w1, b1, w2, b2))
    assert out.shape == (1, IN_SIZE), out.shape
    # Tolerance covers XLA-default-precision matmuls in the reference vs the
    # kernel's f32-accumulated MXU path; the approx reciprocal is gone.
    assert jnp.allclose(out, ref, atol=5e-3, rtol=5e-3), (out, ref)

    # 2) Forced small tile: exercises the multi-tile online softmax and the
    #    boundary-tile masking (200 rows = 3 full tiles of 64 + 8 valid rows).
    out_tiled = jax.block_until_ready(
        one_graph_attention(z, w1, b1, w2, b2, tile_n=64))
    assert jnp.allclose(out_tiled, ref, atol=5e-3, rtol=5e-3), (out_tiled, ref)
    # The two tilings of the same kernel agree much more tightly.
    assert jnp.allclose(out, out_tiled, atol=1e-4, rtol=1e-4), (out, out_tiled)

    print("KERNEL_OK")
</pallas_src>

<mosaic_0001>
module attributes {stable_mosaic.version = 11 : i64} {
  func.func @_one_graph_attention_kernel(%arg0: i32, %arg1: memref<200x16xf32, #tpu.memory_space<vmem>>, %arg2: memref<16x128xf32, #tpu.memory_space<vmem>>, %arg3: memref<1x128xf32, #tpu.memory_space<vmem>>, %arg4: memref<1x128xf32, #tpu.memory_space<vmem>>, %arg5: memref<1x16xf32, #tpu.memory_space<vmem>>, %arg6: memref<1x1xf32, #tpu.memory_space<vmem>>, %arg7: memref<1x1xf32, #tpu.memory_space<vmem>>) attributes {dimension_semantics = [#tpu.dimension_semantics<arbitrary>], iteration_bounds = array<i64: 1>, scalar_prefetch = 0 : i64, scratch_operands = 2 : i64, tpu.core_type = #tpu.core_type<tc>, window_params = [{transform_indices = @transform_0, window_bounds = array<i64: 200, 16>}, {pipeline_mode = #tpu.pipeline_mode<synchronous>, transform_indices = @transform_1, window_bounds = array<i64: 16, 128>}, {pipeline_mode = #tpu.pipeline_mode<synchronous>, transform_indices = @transform_2, window_bounds = array<i64: 1, 128>}, {pipeline_mode = #tpu.pipeline_mode<synchronous>, transform_indices = @transform_3, window_bounds = array<i64: 1, 128>}, {pipeline_mode = #tpu.pipeline_mode<synchronous>, transform_indices = @transform_4, window_bounds = array<i64: 1, 16>}]} {
    %c0_i32 = arith.constant 0 : i32
    %0 = arith.cmpi eq, %arg0, %c0_i32 : i32
    %1 = arith.extui %0 : i1 to i32
    %c0_i32_0 = arith.constant 0 : i32
    %2 = arith.cmpi ne, %1, %c0_i32_0 : i32
    scf.if %2 {
      %cst_26 = arith.constant 0xFF800000 : f32
      %43 = vector.broadcast %cst_26 : f32 to vector<1x1xf32>
      %c0_27 = arith.constant 0 : index
      %c0_28 = arith.constant 0 : index
      %44 = vector.load %arg6[%c0_27, %c0_28] : memref<1x1xf32, #tpu.memory_space<vmem>>, vector<1x1xf32>
      tpu.vector_store %arg6[%c0_27, %c0_28], %43 {strides = array<i32>} : memref<1x1xf32, #tpu.memory_space<vmem>>, vector<1x1xf32>,
      %cst_29 = arith.constant 0.000000e+00 : f32
      %45 = vector.broadcast %cst_29 : f32 to vector<1x1xf32>
      %c0_30 = arith.constant 0 : index
      %c0_31 = arith.constant 0 : index
      %46 = vector.load %arg7[%c0_30, %c0_31] : memref<1x1xf32, #tpu.memory_space<vmem>>, vector<1x1xf32>
      tpu.vector_store %arg7[%c0_30, %c0_31], %45 {strides = array<i32>} : memref<1x1xf32, #tpu.memory_space<vmem>>, vector<1x1xf32>,
      %cst_32 = arith.constant 0.000000e+00 : f32
      %47 = vector.broadcast %cst_32 : f32 to vector<1x16xf32>
      %c0_33 = arith.constant 0 : index
      %c0_34 = arith.constant 0 : index
      %48 = vector.load %arg5[%c0_33, %c0_34] : memref<1x16xf32, #tpu.memory_space<vmem>>, vector<1x16xf32>
      tpu.vector_store %arg5[%c0_33, %c0_34], %47 {strides = array<i32>} : memref<1x16xf32, #tpu.memory_space<vmem>>, vector<1x16xf32>,
    } else {
    }
    %c0 = arith.constant 0 : index
    %c0_1 = arith.constant 0 : index
    %3 = vector.load %arg1[%c0, %c0_1] : memref<200x16xf32, #tpu.memory_space<vmem>>, vector<200x16xf32>
    %c0_2 = arith.constant 0 : index
    %c0_3 = arith.constant 0 : index
    %4 = vector.load %arg2[%c0_2, %c0_3] : memref<16x128xf32, #tpu.memory_space<vmem>>, vector<16x128xf32>
    %cst = arith.constant dense<0.000000e+00> : vector<200x128xf32>
    %5 = tpu.matmul %3, %4, %cst {dimension_numbers = #tpu.dot_dimension_numbers<[1], [0], [0], [1], [0, 0, 1, 1], [], []>} : vector<200x16xf32>, vector<16x128xf32>, vector<200x128xf32> -> vector<200x128xf32>
    %c0_4 = arith.constant 0 : index
    %c0_5 = arith.constant 0 : index
    %6 = vector.load %arg3[%c0_4, %c0_5] : memref<1x128xf32, #tpu.memory_space<vmem>>, vector<1x128xf32>
    %7 = vector.broadcast %6 : vector<1x128xf32> to vector<200x128xf32>
    %8 = arith.addf %5, %7 : vector<200x128xf32>
    %9 = math.tanh %8 : vector<200x128xf32>
    %c0_6 = arith.constant 0 : index
    %c0_7 = arith.constant 0 : index
    %10 = vector.load %arg4[%c0_6, %c0_7] : memref<1x128xf32, #tpu.memory_space<vmem>>, vector<1x128xf32>
    %11 = vector.broadcast %10 : vector<1x128xf32> to vector<200x128xf32>
    %12 = arith.mulf %9, %11 : vector<200x128xf32>
    %cst_8 = arith.constant dense<0.000000e+00> : vector<200xf32>
    %13 = vector.multi_reduction <add>, %12, %cst_8 [1] : vector<200x128xf32> to vector<200xf32>
    %14 = vector.shape_cast %13 : vector<200xf32> to vector<200x1xf32>
    %c0_9 = arith.constant 0 : index
    %c0_10 = arith.constant 0 : index
    %15 = vector.load %arg6[%c0_9, %c0_10] : memref<1x1xf32, #tpu.memory_space<vmem>>, vector<1x1xf32>
    %cst_11 = arith.constant dense<0xFF800000> : vector<1xf32>
    %16 = vector.multi_reduction <maximumf>, %14, %cst_11 [0] : vector<200x1xf32> to vector<1xf32>
    %17 = vector.shape_cast %16 : vector<1xf32> to vector<1x1xf32>
    %18 = arith.maximumf %15, %17 : vector<1x1xf32>
    %19 = arith.subf %15, %18 : vector<1x1xf32>
    %20 = math.exp %19 : vector<1x1xf32>
    %21 = vector.broadcast %18 : vector<1x1xf32> to vector<200x1xf32>
    %22 = arith.subf %14, %21 : vector<200x1xf32>
    %23 = math.exp %22 : vector<200x1xf32>
    %c0_12 = arith.constant 0 : index
    %c0_13 = arith.constant 0 : index
    %24 = vector.load %arg7[%c0_12, %c0_13] : memref<1x1xf32, #tpu.memory_space<vmem>>, vector<1x1xf32>
    %25 = arith.mulf %20, %24 : vector<1x1xf32>
    %cst_14 = arith.constant dense<0.000000e+00> : vector<1xf32>
    %26 = vector.multi_reduction <add>, %23, %cst_14 [0] : vector<200x1xf32> to vector<1xf32>
    %27 = vector.shape_cast %26 : vector<1xf32> to vector<1x1xf32>
    %28 = arith.addf %25, %27 : vector<1x1xf32>
    %c0_15 = arith.constant 0 : index
    %c0_16 = arith.constant 0 : index
    %29 = vector.load %arg7[%c0_15, %c0_16] : memref<1x1xf32, #tpu.memory_space<vmem>>, vector<1x1xf32>
    tpu.vector_store %arg7[%c0_15, %c0_16], %28 {strides = array<i32>} : memref<1x1xf32, #tpu.memory_space<vmem>>, vector<1x1xf32>,
    %c0_17 = arith.constant 0 : index
    %c0_18 = arith.constant 0 : index
    %30 = vector.load %arg5[%c0_17, %c0_18] : memref<1x16xf32, #tpu.memory_space<vmem>>, vector<1x16xf32>
    %31 = vector.broadcast %20 : vector<1x1xf32> to vector<1x16xf32>
    %32 = arith.mulf %31, %30 : vector<1x16xf32>
    %33 = vector.broadcast %23 : vector<200x1xf32> to vector<200x16xf32>
    %34 = arith.mulf %33, %3 : vector<200x16xf32>
    %cst_19 = arith.constant dense<0.000000e+00> : vector<16xf32>
    %35 = vector.multi_reduction <add>, %34, %cst_19 [0] : vector<200x16xf32> to vector<16xf32>
    %36 = vector.shape_cast %35 : vector<16xf32> to vector<1x16xf32>
    %37 = arith.addf %32, %36 : vector<1x16xf32>
    %c0_20 = arith.constant 0 : index
    %c0_21 = arith.constant 0 : index
    %38 = vector.load %arg5[%c0_20, %c0_21] : memref<1x16xf32, #tpu.memory_space<vmem>>, vector<1x16xf32>
    tpu.vector_store %arg5[%c0_20, %c0_21], %37 {strides = array<i32>} : memref<1x16xf32, #tpu.memory_space<vmem>>, vector<1x16xf32>,
    %c0_22 = arith.constant 0 : index
    %c0_23 = arith.constant 0 : index
    %39 = vector.load %arg6[%c0_22, %c0_23] : memref<1x1xf32, #tpu.memory_space<vmem>>, vector<1x1xf32>
    tpu.vector_store %arg6[%c0_22, %c0_23], %18 {strides = array<i32>} : memref<1x1xf32, #tpu.memory_space<vmem>>, vector<1x1xf32>,
    %c0_i32_24 = arith.constant 0 : i32
    %40 = arith.cmpi eq, %arg0, %c0_i32_24 : i32
    %41 = arith.extui %40 : i1 to i32
    %c0_i32_25 = arith.constant 0 : i32
    %42 = arith.cmpi ne, %41, %c0_i32_25 : i32
    scf.if %42 {
      %c0_26 = arith.constant 0 : index
      %c0_27 = arith.constant 0 : index
      %43 = vector.load %arg5[%c0_26, %c0_27] : memref<1x16xf32, #tpu.memory_space<vmem>>, vector<1x16xf32>
      %c0_28 = arith.constant 0 : index
      %c0_29 = arith.constant 0 : index
      %44 = vector.load %arg7[%c0_28, %c0_29] : memref<1x1xf32, #tpu.memory_space<vmem>>, vector<1x1xf32>
      %cst_30 = arith.constant 1.000000e+00 : f32
      %45 = vector.broadcast %cst_30 : f32 to vector<1x1xf32>
      %46 = arith.divf %45, %44 : vector<1x1xf32>
      %47 = vector.broadcast %46 : vector<1x1xf32> to vector<1x16xf32>
      %48 = arith.mulf %43, %47 : vector<1x16xf32>
      %c0_31 = arith.constant 0 : index
      %c0_32 = arith.constant 0 : index
      %49 = vector.load %arg5[%c0_31, %c0_32] : memref<1x16xf32, #tpu.memory_space<vmem>>, vector<1x16xf32>
      tpu.vector_store %arg5[%c0_31, %c0_32], %48 {strides = array<i32>} : memref<1x16xf32, #tpu.memory_space<vmem>>, vector<1x16xf32>,
    } else {
    }
    return
  }
  func.func @transform_0(%arg0: i32) -> (i32, i32) {
    %c0_i32 = arith.constant 0 : i32
    %c0_i32_0 = arith.constant 0 : i32
    return %arg0, %c0_i32 : i32, i32
  }
  func.func @transform_1(%arg0: i32) -> (i32, i32) {
    %c0_i32 = arith.constant 0 : i32
    %c0_i32_0 = arith.constant 0 : i32
    %c0_i32_1 = arith.constant 0 : i32
    return %c0_i32, %c0_i32_0 : i32, i32
  }
  func.func @transform_2(%arg0: i32) -> (i32, i32) {
    %c0_i32 = arith.constant 0 : i32
    %c0_i32_0 = arith.constant 0 : i32
    %c0_i32_1 = arith.constant 0 : i32
    return %c0_i32, %c0_i32_0 : i32, i32
  }
  func.func @transform_3(%arg0: i32) -> (i32, i32) {
    %c0_i32 = arith.constant 0 : i32
    %c0_i32_0 = arith.constant 0 : i32
    %c0_i32_1 = arith.constant 0 : i32
    return %c0_i32, %c0_i32_0 : i32, i32
  }
  func.func @transform_4(%arg0: i32) -> (i32, i32) {
    %c0_i32 = arith.constant 0 : i32
    %c0_i32_0 = arith.constant 0 : i32
    %c0_i32_1 = arith.constant 0 : i32
    return %c0_i32, %c0_i32_0 : i32, i32
  }
}

</mosaic_0001>

<llo_original>
// kernel: tpu_custom_call.1
$region0: #{tpu_custom_call.1}
  #allocation0 [shape = 'u32[]', space=smem, size = 0x4, offset = 0x4, fixed_abs, tag = 'smem constant byte address 0x4 - core index']
  #allocation1 [shape = 'u32[144,128]{1,0:T(1,128)}', space=vmem, size = 0x12000, scoped, tag = 'internal scratch']
  #allocation2 [shape = 'f32[1,1]{1,0:T(1,128)}', space=vmem, size = 0x200, scoped, tag = 'scratch operand']
  #allocation3 [shape = 'f32[1,1]{1,0:T(1,128)}', space=vmem, size = 0x200, scoped, tag = 'scratch operand']
  %s0 = inlined_call_operand.vmem [shape: f32[200,16], index: 0, kind: input, shape index: {}]
  %s1 = inlined_call_operand.vmem [shape: f32[16,128], index: 1, kind: input, shape index: {}]
  %s2 = inlined_call_operand.vmem [shape: f32[1,128], index: 2, kind: input, shape index: {}]
  %s3 = inlined_call_operand.vmem [shape: f32[1,128], index: 3, kind: input, shape index: {}]
  %s4 = inlined_call_operand.hbm [shape: f32[1,16], index: 4, kind: output, shape index: {}]
  %s5 = sld [smem:[#allocation0]]
  $region34: #{tpu_custom_call.1} parent=0
    _
  %s7 = ssub.s32 1, %s5
  %s8 = scalar_select 0, %s7, %s5
  $region1: #{tpu_custom_call.1} parent=0
    #allocation4 [shape = 'u8[512]{0}', space=vmem, size = 0x400, scoped, tag = 'output window, operand 0, single buffered']
    #allocation5 [shape = 's32[1]{0}', space=sflag, size = 0x4, scoped, tag = 'scoped memory for tpu_custom_call.1']
    %9 = vsyncpa [#allocation5], 0
    // Predicated region
    $region2: #{tpu_custom_call.1} parent=1 // pred_check
      _
    $region3: #{tpu_custom_call.1} parent=1 // pred_check_branch
      %11 = sbr.rel (0) target = $region5
    $region4: #{tpu_custom_call.1} parent=1 // pred_region
      _
    $region5: #{tpu_custom_call.1} parent=1 // pred_fallthru
      _
    // Predicated region
    $region6: #{tpu_custom_call.1} parent=1 // pred_check
      _
    $region7: #{tpu_custom_call.1} parent=1 // pred_check_branch
      %13 = sbr.rel (0) target = $region9
    $region8: #{tpu_custom_call.1} parent=1 // pred_region
      _
    $region9: #{tpu_custom_call.1} parent=1 // pred_fallthru
      _
    // Predicated region
    $region10: #{tpu_custom_call.1} parent=1 // pred_check
      _
    $region11: #{tpu_custom_call.1} parent=1 // pred_check_branch
      %15 = sbr.rel (0) target = $region13
    $region12: #{tpu_custom_call.1} parent=1 // pred_region
      _
    $region13: #{tpu_custom_call.1} parent=1 // pred_fallthru
      _
    // Predicated region
    $region14: #{tpu_custom_call.1} parent=1 // pred_check
      _
    $region15: #{tpu_custom_call.1} parent=1 // pred_check_branch
      %17 = sbr.rel (0) target = $region17
    $region16: #{tpu_custom_call.1} parent=1 // pred_region
      _
    $region17: #{tpu_custom_call.1} parent=1 // pred_fallthru
      _
    %p18 = scmp.eq.s32.totalorder 0, 0
    // Predicated region
    $region18: #{tpu_custom_call.1} parent=1 // pred_check
      %p19 = pneg %p18
    $region19: #{tpu_custom_call.1} parent=1 // pred_check_branch
      %21 = sbr.rel (%p19) target = $region21
    $region20: #{tpu_custom_call.1} parent=1 // pred_region
      %vm22 = vcmask 0
      %23 = vst.msk [vmem:[#allocation2] sm:$0x1] %vm22, -inf
      %24 = vst.msk [vmem:[#allocation3] sm:$0x1] %vm22, 0.0
      %vm25 = vcmask 122880
      %26 = vst.msk [vmem:[#allocation4] sm:$0x1] %vm25, 0.0
    $region21: #{tpu_custom_call.1} parent=1 // pred_fallthru
      _
    %v27 = vld [vmem:[%s0] sm:$0xff]
    %v28 = vld [vmem:[%s0 + $0x8] sm:$0xff]
    %v29 = vld [vmem:[%s0 + $0x10] sm:$0xff]
    %v30 = vld [vmem:[%s0 + $0x18] sm:$0xff]
    %v31 = vld [vmem:[%s0 + $0x20] sm:$0xff]
    %v32 = vld [vmem:[%s0 + $0x28] sm:$0xff]
    %v33 = vld [vmem:[%s0 + $0x30] sm:$0xff]
    %v34 = vld [vmem:[%s0 + $0x38] sm:$0xff]
    %v35 = vld [vmem:[%s0 + $0x40] sm:$0xff]
    %v36 = vld [vmem:[%s0 + $0x48] sm:$0xff]
    %v37 = vld [vmem:[%s0 + $0x50] sm:$0xff]
    %v38 = vld [vmem:[%s0 + $0x58] sm:$0xff]
    %v39 = vld [vmem:[%s0 + $0x60] sm:$0xff]
    %v40 = vld [vmem:[%s0 + $0x68] sm:$0xff]
    %v41 = vld [vmem:[%s0 + $0x70] sm:$0xff]
    %v42 = vld [vmem:[%s0 + $0x78] sm:$0xff]
    %v43 = vld [vmem:[%s0 + $0x80] sm:$0xff]
    %v44 = vld [vmem:[%s0 + $0x88] sm:$0xff]
    %v45 = vld [vmem:[%s0 + $0x90] sm:$0xff]
    %v46 = vld [vmem:[%s0 + $0x98] sm:$0xff]
    %v47 = vld [vmem:[%s0 + $0xa0] sm:$0xff]
    %v48 = vld [vmem:[%s0 + $0xa8] sm:$0xff]
    %v49 = vld [vmem:[%s0 + $0xb0] sm:$0xff]
    %v50 = vld [vmem:[%s0 + $0xb8] sm:$0xff]
    %v51 = vld [vmem:[%s0 + $0xc0] sm:$0xff]
    %v52 = vld [vmem:[%s1] sm:$0xff]
    %v53 = vld [vmem:[%s1 + $0x8] sm:$0xff]
    %v54 = vld [vmem:[%s2] sm:$0x1]
    %v56 = vlaneseq
    %v57 = vshrl.u32 %v56, 7
    %v58 = vsub.s32 0, %v57
    %v59 = vrot.slane %v54, %v58
    %vm61 = vcmask 130048
    %v63 = vsel %vm61, %v27, 0
    %v66 = vsel %vm61, %v28, 0
    %v69 = vsel %vm61, %v29, 0
    %v72 = vsel %vm61, %v30, 0
    %v75 = vsel %vm61, %v31, 0
    %v78 = vsel %vm61, %v32, 0
    %v81 = vsel %vm61, %v33, 0
    %v84 = vsel %vm61, %v34, 0
    %v87 = vsel %vm61, %v35, 0
    %v90 = vsel %vm61, %v36, 0
    %v93 = vsel %vm61, %v37, 0
    %v96 = vsel %vm61, %v38, 0
    %v99 = vsel %vm61, %v39, 0
    %v102 = vsel %vm61, %v40, 0
    %v105 = vsel %vm61, %v41, 0
    %v108 = vsel %vm61, %v42, 0
    %v111 = vsel %vm61, %v43, 0
    %v114 = vsel %vm61, %v44, 0
    %v117 = vsel %vm61, %v45, 0
    %v120 = vsel %vm61, %v46, 0
    %v123 = vsel %vm61, %v47, 0
    %v126 = vsel %vm61, %v48, 0
    %v129 = vsel %vm61, %v49, 0
    %v132 = vsel %vm61, %v50, 0
    %v135 = vsel %vm61, %v51, 0
    %137 = vmatprep.subr.mxu0 0.0
    %138 = vmatpush1.msra.mxu0 %v52
    %139 = vmatprep.subr.mxu0 0.0
    %140 = vmatpush1.msra.mxu0 %v53
    %141 = vmatprep.subr.mxu0 0.0
    %142 = vmatpush1.msra.mxu0 0.0
    %143 = vmatprep.subr.mxu0 0.0
    %144 = vmatpush1.msra.mxu0 0.0
    %145 = vmatprep.subr.mxu0 0.0
    %146 = vmatpush1.msra.mxu0 0.0
    %147 = vmatprep.subr.mxu0 0.0
    %148 = vmatpush1.msra.mxu0 0.0
    %149 = vmatprep.subr.mxu0 0.0
    %150 = vmatpush1.msra.mxu0 0.0
    %151 = vmatprep.subr.mxu0 0.0
    %152 = vmatpush1.msra.mxu0 0.0
    %153 = vmatprep.subr.mxu0 0.0
    %154 = vmatpush1.msra.mxu0 0.0
    %155 = vmatprep.subr.mxu0 0.0
    %156 = vmatpush1.msra.mxu0 0.0
    %157 = vmatprep.subr.mxu0 0.0
    %158 = vmatpush1.msra.mxu0 0.0
    %159 = vmatprep.subr.mxu0 0.0
    %160 = vmatpush1.msra.mxu0 0.0
    %161 = vmatprep.subr.mxu0 0.0
    %162 = vmatpush1.msra.mxu0 0.0
    %163 = vmatprep.subr.mxu0 0.0
    %164 = vmatpush1.msra.mxu0 0.0
    %165 = vmatprep.subr.mxu0 0.0
    %166 = vmatpush1.msra.mxu0 0.0
    %167 = vmatprep.subr.mxu0 0.0
    %168 = vmatpush1.msra.mxu0 0.0
    %169 = vmatprep.subr.mxu0 0.0
    %170 = vmatpush1.msra.mxu0 0.0
    %171 = vmatprep.subr.mxu0 0.0
    %172 = vmatpush1.msra.mxu0 0.0
    %173 = vmatprep.subr.mxu0 0.0
    %174 = vmatpush1.msra.mxu0 0.0
    %175 = vmatprep.subr.mxu0 0.0
    %176 = vmatpush1.msra.mxu0 0.0
    %177 = vmatprep.subr.mxu0 0.0
    %178 = vmatpush1.msra.mxu0 0.0
    %179 = vmatprep.subr.mxu0 0.0
    %180 = vmatpush1.msra.mxu0 0.0
    %181 = vmatprep.subr.mxu0 0.0
    %182 = vmatpush1.msra.mxu0 0.0
    %183 = vmatprep.subr.mxu0 0.0
    %184 = vmatpush1.msra.mxu0 0.0
    %185 = vmatprep.subr.mxu0 0.0
    %186 = vmatpush1.msra.mxu0 0.0
    %187 = vmatprep.subr.mxu0 0.0
    %188 = vmatpush1.msra.mxu0 0.0
    %189 = vmatprep.subr.mxu0 0.0
    %190 = vmatpush1.msra.mxu0 0.0
    %191 = vmatprep.subr.mxu0 0.0
    %192 = vmatpush1.msra.mxu0 0.0
    %193 = vmatprep.subr.mxu0 0.0
    %194 = vmatpush1.msra.mxu0 0.0
    %195 = vmatprep.subr.mxu0 0.0
    %196 = vmatpush1.msra.mxu0 0.0
    %197 = vmatprep.subr.mxu0 0.0
    %198 = vmatpush1.msra.mxu0 0.0
    %199 = vmatprep.subr.mxu0 0.0
    %200 = vmatpush1.msra.mxu0 0.0
    %201 = vmatprep.mubr.f32.mxu0 0.0
    %202 = vmatmul.mubr.f32.gmra.mrb[0].mxu0 %v63
    %v203 = vpop.f32.mrb[0].mxu0
    %v204 = vadd.f32 %v59, %v203
    %v205 = vpop.f32.mrb[0].mxu0
    %206 = vmatprep.mubr.f32.mxu0 0.0
    %207 = vmatmul.mubr.f32.gmra.mrb[0].mxu0 %v66
    %v208 = vpop.f32.mrb[0].mxu0
    %v209 = vadd.f32 %v59, %v208
    %v210 = vpop.f32.mrb[0].mxu0
    %211 = vmatprep.mubr.f32.mxu0 0.0
    %212 = vmatmul.mubr.f32.gmra.mrb[0].mxu0 %v69
    %v213 = vpop.f32.mrb[0].mxu0
    %v214 = vadd.f32 %v59, %v213
    %v215 = vpop.f32.mrb[0].mxu0
    %216 = vmatprep.mubr.f32.mxu0 0.0
    %217 = vmatmul.mubr.f32.gmra.mrb[0].mxu0 %v72
    %v218 = vpop.f32.mrb[0].mxu0
    %v219 = vadd.f32 %v59, %v218
    %v220 = vpop.f32.mrb[0].mxu0
    %221 = vmatprep.mubr.f32.mxu0 0.0
    %222 = vmatmul.mubr.f32.gmra.mrb[0].mxu0 %v75
    %v223 = vpop.f32.mrb[0].mxu0
    %v224 = vadd.f32 %v59, %v223
    %v225 = vpop.f32.mrb[0].mxu0
    %226 = vmatprep.mubr.f32.mxu0 0.0
    %227 = vmatmul.mubr.f32.gmra.mrb[0].mxu0 %v78
    %v228 = vpop.f32.mrb[0].mxu0
    %v229 = vadd.f32 %v59, %v228
    %v230 = vpop.f32.mrb[0].mxu0
    %231 = vmatprep.mubr.f32.mxu0 0.0
    %232 = vmatmul.mubr.f32.gmra.mrb[0].mxu0 %v81
    %v233 = vpop.f32.mrb[0].mxu0
    %v234 = vadd.f32 %v59, %v233
    %v235 = vpop.f32.mrb[0].mxu0
    %236 = vmatprep.mubr.f32.mxu0 0.0
    %237 = vmatmul.mubr.f32.gmra.mrb[0].mxu0 %v84
    %v238 = vpop.f32.mrb[0].mxu0
    %v239 = vadd.f32 %v59, %v238
    %v240 = vpop.f32.mrb[0].mxu0
    %241 = vmatprep.mubr.f32.mxu0 0.0
    %242 = vmatmul.mubr.f32.gmra.mrb[0].mxu0 %v87
    %v243 = vpop.f32.mrb[0].mxu0
    %v244 = vadd.f32 %v59, %v243
    %v245 = vpop.f32.mrb[0].mxu0
    %246 = vmatprep.mubr.f32.mxu0 0.0
    %247 = vmatmul.mubr.f32.gmra.mrb[0].mxu0 %v90
    %v248 = vpop.f32.mrb[0].mxu0
    %v249 = vadd.f32 %v59, %v248
    %v250 = vpop.f32.mrb[0].mxu0
    %251 = vmatprep.mubr.f32.mxu0 0.0
    %252 = vmatmul.mubr.f32.gmra.mrb[0].mxu0 %v93
    %v253 = vpop.f32.mrb[0].mxu0
    %v254 = vadd.f32 %v59, %v253
    %v255 = vpop.f32.mrb[0].mxu0
    %256 = vmatprep.mubr.f32.mxu0 0.0
    %257 = vmatmul.mubr.f32.gmra.mrb[0].mxu0 %v96
    %v258 = vpop.f32.mrb[0].mxu0
    %v259 = vadd.f32 %v59, %v258
    %v260 = vpop.f32.mrb[0].mxu0
    %261 = vmatprep.mubr.f32.mxu0 0.0
    %262 = vmatmul.mubr.f32.gmra.mrb[0].mxu0 %v99
    %v263 = vpop.f32.mrb[0].mxu0
    %v264 = vadd.f32 %v59, %v263
    %v265 = vpop.f32.mrb[0].mxu0
    %266 = vmatprep.mubr.f32.mxu0 0.0
    %267 = vmatmul.mubr.f32.gmra.mrb[0].mxu0 %v102
    %v268 = vpop.f32.mrb[0].mxu0
    %v269 = vadd.f32 %v59, %v268
    %v270 = vpop.f32.mrb[0].mxu0
    %271 = vmatprep.mubr.f32.mxu0 0.0
    %272 = vmatmul.mubr.f32.gmra.mrb[0].mxu0 %v105
    %v273 = vpop.f32.mrb[0].mxu0
    %v274 = vadd.f32 %v59, %v273
    %v275 = vpop.f32.mrb[0].mxu0
    %276 = vmatprep.mubr.f32.mxu0 0.0
    %277 = vmatmul.mubr.f32.gmra.mrb[0].mxu0 %v108
    %v278 = vpop.f32.mrb[0].mxu0
    %v279 = vadd.f32 %v59, %v278
    %v280 = vpop.f32.mrb[0].mxu0
    %281 = vmatprep.mubr.f32.mxu0 0.0
    %282 = vmatmul.mubr.f32.gmra.mrb[0].mxu0 %v111
    %v283 = vpop.f32.mrb[0].mxu0
    %v284 = vadd.f32 %v59, %v283
    %v285 = vpop.f32.mrb[0].mxu0
    %286 = vmatprep.mubr.f32.mxu0 0.0
    %287 = vmatmul.mubr.f32.gmra.mrb[0].mxu0 %v114
    %v288 = vpop.f32.mrb[0].mxu0
    %v289 = vadd.f32 %v59, %v288
    %v290 = vpop.f32.mrb[0].mxu0
    %291 = vmatprep.mubr.f32.mxu0 0.0
    %292 = vmatmul.mubr.f32.gmra.mrb[0].mxu0 %v117
    %v293 = vpop.f32.mrb[0].mxu0
    %v294 = vadd.f32 %v59, %v293
    %v295 = vpop.f32.mrb[0].mxu0
    %296 = vmatprep.mubr.f32.mxu0 0.0
    %297 = vmatmul.mubr.f32.gmra.mrb[0].mxu0 %v120
    %v298 = vpop.f32.mrb[0].mxu0
    %v299 = vadd.f32 %v59, %v298
    %v300 = vpop.f32.mrb[0].mxu0
    %301 = vmatprep.mubr.f32.mxu0 0.0
    %302 = vmatmul.mubr.f32.gmra.mrb[0].mxu0 %v123
    %v303 = vpop.f32.mrb[0].mxu0
    %v304 = vadd.f32 %v59, %v303
    %v305 = vpop.f32.mrb[0].mxu0
    %306 = vmatprep.mubr.f32.mxu0 0.0
    %307 = vmatmul.mubr.f32.gmra.mrb[0].mxu0 %v126
    %v308 = vpop.f32.mrb[0].mxu0
    %v309 = vadd.f32 %v59, %v308
    %v310 = vpop.f32.mrb[0].mxu0
    %311 = vmatprep.mubr.f32.mxu0 0.0
    %312 = vmatmul.mubr.f32.gmra.mrb[0].mxu0 %v129
    %v313 = vpop.f32.mrb[0].mxu0
    %v314 = vadd.f32 %v59, %v313
    %v315 = vpop.f32.mrb[0].mxu0
    %316 = vmatprep.mubr.f32.mxu0 0.0
    %317 = vmatmul.mubr.f32.gmra.mrb[0].mxu0 %v132
    %v318 = vpop.f32.mrb[0].mxu0
    %v319 = vadd.f32 %v59, %v318
    %v320 = vpop.f32.mrb[0].mxu0
    %321 = vmatprep.mubr.f32.mxu0 0.0
    %322 = vmatmul.mubr.f32.gmra.mrb[0].mxu0 %v135
    %v323 = vpop.f32.mrb[0].mxu0
    %v324 = vadd.f32 %v59, %v323
    %v325 = vpop.f32.mrb[0].mxu0
    %326 = vdwg.mxu0
    %v327 = vtanh.pop %v204
    %v328 = vtanh.pop %v209
    %v329 = vtanh.pop %v214
    %v330 = vtanh.pop %v219
    %v331 = vtanh.pop %v224
    %v332 = vtanh.pop %v229
    %v333 = vtanh.pop %v234
    %v334 = vtanh.pop %v239
    %v335 = vtanh.pop %v244
    %v336 = vtanh.pop %v249
    %v337 = vtanh.pop %v254
    %v338 = vtanh.pop %v259
    %v339 = vtanh.pop %v264
    %v340 = vtanh.pop %v269
    %v341 = vtanh.pop %v274
    %v342 = vtanh.pop %v279
    %v343 = vtanh.pop %v284
    %v344 = vtanh.pop %v289
    %v345 = vtanh.pop %v294
    %v346 = vtanh.pop %v299
    %v347 = vtanh.pop %v304
    %v348 = vtanh.pop %v309
    %v349 = vtanh.pop %v314
    %v350 = vtanh.pop %v319
    %v351 = vtanh.pop %v324
    %v352 = vld [vmem:[%s3] sm:$0x1]
    %v354 = vlaneseq
    %v355 = vshrl.u32 %v354, 7
    %v356 = vsub.s32 0, %v355
    %v357 = vrot.slane %v352, %v356
    %v359 = vmul.f32 %v327, %v357
    %v360 = vmul.f32 %v328, %v357
    %v361 = vmul.f32 %v329, %v357
    %v362 = vmul.f32 %v330, %v357
    %v363 = vmul.f32 %v331, %v357
    %v364 = vmul.f32 %v332, %v357
    %v365 = vmul.f32 %v333, %v357
    %v366 = vmul.f32 %v334, %v357
    %v367 = vmul.f32 %v335, %v357
    %v368 = vmul.f32 %v336, %v357
    %v369 = vmul.f32 %v337, %v357
    %v370 = vmul.f32 %v338, %v357
    %v371 = vmul.f32 %v339, %v357
    %v372 = vmul.f32 %v340, %v357
    %v373 = vmul.f32 %v341, %v357
    %v374 = vmul.f32 %v342, %v357
    %v375 = vmul.f32 %v343, %v357
    %v376 = vmul.f32 %v344, %v357
    %v377 = vmul.f32 %v345, %v357
    %v378 = vmul.f32 %v346, %v357
    %v379 = vmul.f32 %v347, %v357
    %v380 = vmul.f32 %v348, %v357
    %v381 = vmul.f32 %v349, %v357
    %v382 = vmul.f32 %v350, %v357
    %v383 = vmul.f32 %v351, %v357
    %384 = vadd.xlane.f32.xlu0 %v359
    %v385 = vpop.xlane.xlu0 %384
    %386 = vadd.xlane.f32.xlu0 %v360
    %v387 = vpop.xlane.xlu0 %386
    %388 = vadd.xlane.f32.xlu0 %v361
    %v389 = vpop.xlane.xlu0 %388
    %390 = vadd.xlane.f32.xlu0 %v362
    %v391 = vpop.xlane.xlu0 %390
    %392 = vadd.xlane.f32.xlu0 %v363
    %v393 = vpop.xlane.xlu0 %392
    %394 = vadd.xlane.f32.xlu0 %v364
    %v395 = vpop.xlane.xlu0 %394
    %396 = vadd.xlane.f32.xlu0 %v365
    %v397 = vpop.xlane.xlu0 %396
    %398 = vadd.xlane.f32.xlu0 %v366
    %v399 = vpop.xlane.xlu0 %398
    %400 = vadd.xlane.f32.xlu0 %v367
    %v401 = vpop.xlane.xlu0 %400
    %402 = vadd.xlane.f32.xlu0 %v368
    %v403 = vpop.xlane.xlu0 %402
    %404 = vadd.xlane.f32.xlu0 %v369
    %v405 = vpop.xlane.xlu0 %404
    %406 = vadd.xlane.f32.xlu0 %v370
    %v407 = vpop.xlane.xlu0 %406
    %408 = vadd.xlane.f32.xlu0 %v371
    %v409 = vpop.xlane.xlu0 %408
    %410 = vadd.xlane.f32.xlu0 %v372
    %v411 = vpop.xlane.xlu0 %410
    %412 = vadd.xlane.f32.xlu0 %v373
    %v413 = vpop.xlane.xlu0 %412
    %414 = vadd.xlane.f32.xlu0 %v374
    %v415 = vpop.xlane.xlu0 %414
    %416 = vadd.xlane.f32.xlu0 %v375
    %v417 = vpop.xlane.xlu0 %416
    %418 = vadd.xlane.f32.xlu0 %v376
    %v419 = vpop.xlane.xlu0 %418
    %420 = vadd.xlane.f32.xlu0 %v377
    %v421 = vpop.xlane.xlu0 %420
    %422 = vadd.xlane.f32.xlu0 %v378
    %v423 = vpop.xlane.xlu0 %422
    %424 = vadd.xlane.f32.xlu0 %v379
    %v425 = vpop.xlane.xlu0 %424
    %426 = vadd.xlane.f32.xlu0 %v380
    %v427 = vpop.xlane.xlu0 %426
    %428 = vadd.xlane.f32.xlu0 %v381
    %v429 = vpop.xlane.xlu0 %428
    %430 = vadd.xlane.f32.xlu0 %v382
    %v431 = vpop.xlane.xlu0 %430
    %432 = vadd.xlane.f32.xlu0 %v383
    %v433 = vpop.xlane.xlu0 %432
    %v434 = vld [vmem:[#allocation2] sm:$0x1]
    %v435 = vmax.f32 %v385, %v393
    %v436 = vmax.f32 %v387, %v395
    %v437 = vmax.f32 %v389, %v397
    %v438 = vmax.f32 %v391, %v399
    %v439 = vmax.f32 %v435, %v401
    %v440 = vmax.f32 %v436, %v403
    %v441 = vmax.f32 %v437, %v405
    %v442 = vmax.f32 %v438, %v407
    %v443 = vmax.f32 %v439, %v409
    %v444 = vmax.f32 %v440, %v411
    %v445 = vmax.f32 %v441, %v413
    %v446 = vmax.f32 %v442, %v415
    %v447 = vmax.f32 %v443, %v417
    %v448 = vmax.f32 %v444, %v419
    %v449 = vmax.f32 %v445, %v421
    %v450 = vmax.f32 %v446, %v423
    %v451 = vmax.f32 %v447, %v425
    %v452 = vmax.f32 %v448, %v427
    %v453 = vmax.f32 %v449, %v429
    %v454 = vmax.f32 %v450, %v431
    %v455 = vmax.f32 %v451, %v433
    %v456 = vmax.f32 %v455, %v452
    %v457 = vmax.f32 %v453, %v454
    %v458 = vmax.f32 %v456, %v457
    %v459 = vrot.slane %v458, 4
    %v460 = vmax.f32 %v458, %v459
    %v461 = vrot.slane %v460, 2
    %v462 = vmax.f32 %v460, %v461
    %v463 = vrot.slane %v462, 1
    %v464 = vmax.f32 %v462, %v463
    %v465 = vmax.f32 %v434, %v464
    %v466 = vsub.f32 %v434, %v465
    %v467 = vmul.f32 %v466, 1.442695
    %v468 = vpow.pop %v467
    %v470 = vlaneseq
    %v471 = vshrl.u32 %v470, 7
    %v472 = vsub.s32 0, %v471
    %v473 = vrot.slane %v465, %v472
    %v475 = vsub.f32 %v385, %v473
    %v476 = vsub.f32 %v387, %v473
    %v477 = vsub.f32 %v389, %v473
    %v478 = vsub.f32 %v391, %v473
    %v479 = vsub.f32 %v393, %v473
    %v480 = vsub.f32 %v395, %v473
    %v481 = vsub.f32 %v397, %v473
    %v482 = vsub.f32 %v399, %v473
    %v483 = vsub.f32 %v401, %v473
    %v484 = vsub.f32 %v403, %v473
    %v485 = vsub.f32 %v405, %v473
    %v486 = vsub.f32 %v407, %v473
    %v487 = vsub.f32 %v409, %v473
    %v488 = vsub.f32 %v411, %v473
    %v489 = vsub.f32 %v413, %v473
    %v490 = vsub.f32 %v415, %v473
    %v491 = vsub.f32 %v417, %v473
    %v492 = vsub.f32 %v419, %v473
    %v493 = vsub.f32 %v421, %v473
    %v494 = vsub.f32 %v423, %v473
    %v495 = vsub.f32 %v425, %v473
    %v496 = vsub.f32 %v427, %v473
    %v497 = vsub.f32 %v429, %v473
    %v498 = vsub.f32 %v431, %v473
    %v499 = vsub.f32 %v433, %v473
    %v500 = vmul.f32 %v475, 1.442695
    %v501 = vpow.pop %v500
    %v502 = vmul.f32 %v476, 1.442695
    %v503 = vpow.pop %v502
    %v504 = vmul.f32 %v477, 1.442695
    %v505 = vpow.pop %v504
    %v506 = vmul.f32 %v478, 1.442695
    %v507 = vpow.pop %v506
    %v508 = vmul.f32 %v479, 1.442695
    %v509 = vpow.pop %v508
    %v510 = vmul.f32 %v480, 1.442695
    %v511 = vpow.pop %v510
    %v512 = vmul.f32 %v481, 1.442695
    %v513 = vpow.pop %v512
    %v514 = vmul.f32 %v482, 1.442695
    %v515 = vpow.pop %v514
    %v516 = vmul.f32 %v483, 1.442695
    %v517 = vpow.pop %v516
    %v518 = vmul.f32 %v484, 1.442695
    %v519 = vpow.pop %v518
    %v520 = vmul.f32 %v485, 1.442695
    %v521 = vpow.pop %v520
    %v522 = vmul.f32 %v486, 1.442695
    %v523 = vpow.pop %v522
    %v524 = vmul.f32 %v487, 1.442695
    %v525 = vpow.pop %v524
    %v526 = vmul.f32 %v488, 1.442695
    %v527 = vpow.pop %v526
    %v528 = vmul.f32 %v489, 1.442695
    %v529 = vpow.pop %v528
    %v530 = vmul.f32 %v490, 1.442695
    %v531 = vpow.pop %v530
    %v532 = vmul.f32 %v491, 1.442695
    %v533 = vpow.pop %v532
    %v534 = vmul.f32 %v492, 1.442695
    %v535 = vpow.pop %v534
    %v536 = vmul.f32 %v493, 1.442695
    %v537 = vpow.pop %v536
    %v538 = vmul.f32 %v494, 1.442695
    %v539 = vpow.pop %v538
    %v540 = vmul.f32 %v495, 1.442695
    %v541 = vpow.pop %v540
    %v542 = vmul.f32 %v496, 1.442695
    %v543 = vpow.pop %v542
    %v544 = vmul.f32 %v497, 1.442695
    %v545 = vpow.pop %v544
    %v546 = vmul.f32 %v498, 1.442695
    %v547 = vpow.pop %v546
    %v548 = vmul.f32 %v499, 1.442695
    %v549 = vpow.pop %v548
    %v550 = vld [vmem:[#allocation3] sm:$0x1]
    %v551 = vmul.f32 %v468, %v550
    %vm552 = vcmask 7168
    %v553 = vsel %vm552, %v501, 0.0
    %v554 = vsel %vm552, %v503, 0.0
    %v555 = vadd.f32 %v553, %v554
    %v556 = vsel %vm552, %v505, 0.0
    %v557 = vadd.f32 %v555, %v556
    %v558 = vsel %vm552, %v507, 0.0
    %v559 = vadd.f32 %v557, %v558
    %v560 = vsel %vm552, %v509, 0.0
    %v561 = vadd.f32 %v559, %v560
    %v562 = vsel %vm552, %v511, 0.0
    %v563 = vadd.f32 %v561, %v562
    %v564 = vsel %vm552, %v513, 0.0
    %v565 = vadd.f32 %v563, %v564
    %v566 = vsel %vm552, %v515, 0.0
    %v567 = vadd.f32 %v565, %v566
    %v568 = vsel %vm552, %v517, 0.0
    %v569 = vadd.f32 %v567, %v568
    %v570 = vsel %vm552, %v519, 0.0
    %v571 = vadd.f32 %v569, %v570
    %v572 = vsel %vm552, %v521, 0.0
    %v573 = vadd.f32 %v571, %v572
    %v574 = vsel %vm552, %v523, 0.0
    %v575 = vadd.f32 %v573, %v574
    %v576 = vsel %vm552, %v525, 0.0
    %v577 = vadd.f32 %v575, %v576
    %v578 = vsel %vm552, %v527, 0.0
    %v579 = vadd.f32 %v577, %v578
    %v580 = vsel %vm552, %v529, 0.0
    %v581 = vadd.f32 %v579, %v580
    %v582 = vsel %vm552, %v531, 0.0
    %v583 = vadd.f32 %v581, %v582
    %v584 = vsel %vm552, %v533, 0.0
    %v585 = vadd.f32 %v583, %v584
    %v586 = vsel %vm552, %v535, 0.0
    %v587 = vadd.f32 %v585, %v586
    %v588 = vsel %vm552, %v537, 0.0
    %v589 = vadd.f32 %v587, %v588
    %v590 = vsel %vm552, %v539, 0.0
    %v591 = vadd.f32 %v589, %v590
    %v592 = vsel %vm552, %v541, 0.0
    %v593 = vadd.f32 %v591, %v592
    %v594 = vsel %vm552, %v543, 0.0
    %v595 = vadd.f32 %v593, %v594
    %v596 = vsel %vm552, %v545, 0.0
    %v597 = vadd.f32 %v595, %v596
    %v598 = vsel %vm552, %v547, 0.0
    %v599 = vadd.f32 %v597, %v598
    %v600 = vsel %vm552, %v549, 0.0
    %v601 = vadd.f32 %v599, %v600
    %v602 = vrot.slane %v601, 4
    %v603 = vadd.f32 %v601, %v602
    %v604 = vrot.slane %v603, 2
    %v605 = vadd.f32 %v603, %v604
    %v606 = vrot.slane %v605, 1
    %v607 = vadd.f32 %v605, %v606
    %v608 = vadd.f32 %v551, %v607
    %vm609 = vcmask 0
    %610 = vst.msk [vmem:[#allocation3] sm:$0x1] %vm609, %v608
    %v611 = vld [vmem:[#allocation4] sm:$0x1]
    %613 = vset.pattern.permute.xlu0 0
    %614 = vperm.xlu0 %613, %v468
    %v615 = vpop.permute.xlu0 %614
    %v617 = vlaneseq
    %v618 = vshrl.u32 %v617, 7
    %v619 = vsub.s32 0, %v618
    %v620 = vrot.slane %v615, %v619
    %v621 = vmul.f32 %v620, %v611
    %623 = vset.pattern.permute.xlu0 0
    %624 = vperm.xlu0 %623, %v501
    %v625 = vpop.permute.xlu0 %624
    %628 = vset.pattern.permute.xlu0 0
    %629 = vperm.xlu0 %628, %v503
    %v630 = vpop.permute.xlu0 %629
    %633 = vset.pattern.permute.xlu0 0
    %634 = vperm.xlu0 %633, %v505
    %v635 = vpop.permute.xlu0 %634
    %638 = vset.pattern.permute.xlu0 0
    %639 = vperm.xlu0 %638, %v507
    %v640 = vpop.permute.xlu0 %639
    %643 = vset.pattern.permute.xlu0 0
    %644 = vperm.xlu0 %643, %v509
    %v645 = vpop.permute.xlu0 %644
    %648 = vset.pattern.permute.xlu0 0
    %649 = vperm.xlu0 %648, %v511
    %v650 = vpop.permute.xlu0 %649
    %653 = vset.pattern.permute.xlu0 0
    %654 = vperm.xlu0 %653, %v513
    %v655 = vpop.permute.xlu0 %654
    %658 = vset.pattern.permute.xlu0 0
    %659 = vperm.xlu0 %658, %v515
    %v660 = vpop.permute.xlu0 %659
    %663 = vset.pattern.permute.xlu0 0
    %664 = vperm.xlu0 %663, %v517
    %v665 = vpop.permute.xlu0 %664
    %668 = vset.pattern.permute.xlu0 0
    %669 = vperm.xlu0 %668, %v519
    %v670 = vpop.permute.xlu0 %669
    %673 = vset.pattern.permute.xlu0 0
    %674 = vperm.xlu0 %673, %v521
    %v675 = vpop.permute.xlu0 %674
    %678 = vset.pattern.permute.xlu0 0
    %679 = vperm.xlu0 %678, %v523
    %v680 = vpop.permute.xlu0 %679
    %683 = vset.pattern.permute.xlu0 0
    %684 = vperm.xlu0 %683, %v525
    %v685 = vpop.permute.xlu0 %684
    %688 = vset.pattern.permute.xlu0 0
    %689 = vperm.xlu0 %688, %v527
    %v690 = vpop.permute.xlu0 %689
    %693 = vset.pattern.permute.xlu0 0
    %694 = vperm.xlu0 %693, %v529
    %v695 = vpop.permute.xlu0 %694
    %698 = vset.pattern.permute.xlu0 0
    %699 = vperm.xlu0 %698, %v531
    %v700 = vpop.permute.xlu0 %699
    %703 = vset.pattern.permute.xlu0 0
    %704 = vperm.xlu0 %703, %v533
    %v705 = vpop.permute.xlu0 %704
    %708 = vset.pattern.permute.xlu0 0
    %709 = vperm.xlu0 %708, %v535
    %v710 = vpop.permute.xlu0 %709
    %713 = vset.pattern.permute.xlu0 0
    %714 = vperm.xlu0 %713, %v537
    %v715 = vpop.permute.xlu0 %714
    %718 = vset.pattern.permute.xlu0 0
    %719 = vperm.xlu0 %718, %v539
    %v720 = vpop.permute.xlu0 %719
    %723 = vset.pattern.permute.xlu0 0
    %724 = vperm.xlu0 %723, %v541
    %v725 = vpop.permute.xlu0 %724
    %728 = vset.pattern.permute.xlu0 0
    %729 = vperm.xlu0 %728, %v543
    %v730 = vpop.permute.xlu0 %729
    %733 = vset.pattern.permute.xlu0 0
    %734 = vperm.xlu0 %733, %v545
    %v735 = vpop.permute.xlu0 %734
    %738 = vset.pattern.permute.xlu0 0
    %739 = vperm.xlu0 %738, %v547
    %v740 = vpop.permute.xlu0 %739
    %743 = vset.pattern.permute.xlu0 0
    %744 = vperm.xlu0 %743, %v549
    %v745 = vpop.permute.xlu0 %744
    %v747 = vmul.f32 %v625, %v27
    %v748 = vmul.f32 %v630, %v28
    %v749 = vmul.f32 %v635, %v29
    %v750 = vmul.f32 %v640, %v30
    %v751 = vmul.f32 %v645, %v31
    %v752 = vmul.f32 %v650, %v32
    %v753 = vmul.f32 %v655, %v33
    %v754 = vmul.f32 %v660, %v34
    %v755 = vmul.f32 %v665, %v35
    %v756 = vmul.f32 %v670, %v36
    %v757 = vmul.f32 %v675, %v37
    %v758 = vmul.f32 %v680, %v38
    %v759 = vmul.f32 %v685, %v39
    %v760 = vmul.f32 %v690, %v40
    %v761 = vmul.f32 %v695, %v41
    %v762 = vmul.f32 %v700, %v42
    %v763 = vmul.f32 %v705, %v43
    %v764 = vmul.f32 %v710, %v44
    %v765 = vmul.f32 %v715, %v45
    %v766 = vmul.f32 %v720, %v46
    %v767 = vmul.f32 %v725, %v47
    %v768 = vmul.f32 %v730, %v48
    %v769 = vmul.f32 %v735, %v49
    %v770 = vmul.f32 %v740, %v50
    %v771 = vmul.f32 %v745, %v51
    %v772 = vsel %vm61, %v747, 0.0
    %v773 = vsel %vm61, %v748, 0.0
    %v774 = vadd.f32 %v772, %v773
    %v775 = vsel %vm61, %v749, 0.0
    %v776 = vadd.f32 %v774, %v775
    %v777 = vsel %vm61, %v750, 0.0
    %v778 = vadd.f32 %v776, %v777
    %v779 = vsel %vm61, %v751, 0.0
    %v780 = vadd.f32 %v778, %v779
    %v781 = vsel %vm61, %v752, 0.0
    %v782 = vadd.f32 %v780, %v781
    %v783 = vsel %vm61, %v753, 0.0
    %v784 = vadd.f32 %v782, %v783
    %v785 = vsel %vm61, %v754, 0.0
    %v786 = vadd.f32 %v784, %v785
    %v787 = vsel %vm61, %v755, 0.0
    %v788 = vadd.f32 %v786, %v787
    %v789 = vsel %vm61, %v756, 0.0
    %v790 = vadd.f32 %v788, %v789
    %v791 = vsel %vm61, %v757, 0.0
    %v792 = vadd.f32 %v790, %v791
    %v793 = vsel %vm61, %v758, 0.0
    %v794 = vadd.f32 %v792, %v793
    %v795 = vsel %vm61, %v759, 0.0
    %v796 = vadd.f32 %v794, %v795
    %v797 = vsel %vm61, %v760, 0.0
    %v798 = vadd.f32 %v796, %v797
    %v799 = vsel %vm61, %v761, 0.0
    %v800 = vadd.f32 %v798, %v799
    %v801 = vsel %vm61, %v762, 0.0
    %v802 = vadd.f32 %v800, %v801
    %v803 = vsel %vm61, %v763, 0.0
    %v804 = vadd.f32 %v802, %v803
    %v805 = vsel %vm61, %v764, 0.0
    %v806 = vadd.f32 %v804, %v805
    %v807 = vsel %vm61, %v765, 0.0
    %v808 = vadd.f32 %v806, %v807
    %v809 = vsel %vm61, %v766, 0.0
    %v810 = vadd.f32 %v808, %v809
    %v811 = vsel %vm61, %v767, 0.0
    %v812 = vadd.f32 %v810, %v811
    %v813 = vsel %vm61, %v768, 0.0
    %v814 = vadd.f32 %v812, %v813
    %v815 = vsel %vm61, %v769, 0.0
    %v816 = vadd.f32 %v814, %v815
    %v817 = vsel %vm61, %v770, 0.0
    %v818 = vadd.f32 %v816, %v817
    %v819 = vsel %vm61, %v771, 0.0
    %v820 = vadd.f32 %v818, %v819
    %v821 = vrot.slane %v820, 4
    %v822 = vadd.f32 %v820, %v821
    %v823 = vrot.slane %v822, 2
    %v824 = vadd.f32 %v822, %v823
    %v825 = vrot.slane %v824, 1
    %v826 = vadd.f32 %v824, %v825
    %v827 = vadd.f32 %v621, %v826
    %vm828 = vcmask 122880
    %829 = vst.msk [vmem:[#allocation4] sm:$0x1] %vm828, %v827
    %830 = vst.msk [vmem:[#allocation2] sm:$0x1] %vm609, %v465
    // Predicated region
    $region22: #{tpu_custom_call.1} parent=1 // pred_check
      %p831 = pneg %p18
    $region23: #{tpu_custom_call.1} parent=1 // pred_check_branch
      %833 = sbr.rel (%p831) target = $region25
    $region24: #{tpu_custom_call.1} parent=1 // pred_region
      %v834 = vld [vmem:[#allocation4] sm:$0x1]
      %v835 = vld [vmem:[#allocation3] sm:$0x1]
      %v836 = vrcp.pop %v835
      %v837 = vmul.f32 1.0, %v836
      %839 = vset.pattern.permute.xlu0 0
      %840 = vperm.xlu0 %839, %v837
      %v841 = vpop.permute.xlu0 %840
      %v843 = vlaneseq
      %v844 = vshrl.u32 %v843, 7
      %v845 = vsub.s32 0, %v844
      %v846 = vrot.slane %v841, %v845
      %v847 = vmul.f32 %v834, %v846
      %848 = vst.msk [vmem:[#allocation4] sm:$0x1] %vm828, %v847
    $region25: #{tpu_custom_call.1} parent=1 // pred_fallthru
      _
    // Predicated region
    $region26: #{tpu_custom_call.1} parent=1 // pred_check
      _
    $region27: #{tpu_custom_call.1} parent=1 // pred_check_branch
      %850 = sbr.rel (0) target = $region29
    $region28: #{tpu_custom_call.1} parent=1 // pred_region
      %s852 = ssub.s32 16, 16
      %853 = vsyncadd [#allocation5], %s852
      %s855 = sshll.u32 [#allocation4], 4
      %s856 = int_to_ptr.vmem [resolvable:$true] %s855
      %858 = dma.vmem_to_hbm [thread:$0]  %s856, 16, %s4, [#allocation5]
    $region29: #{tpu_custom_call.1} parent=1 // pred_fallthru
      _
    // Predicated region
    $region30: #{tpu_custom_call.1} parent=1 // pred_check
      _
    $region31: #{tpu_custom_call.1} parent=1 // pred_check_branch
      %860 = sbr.rel (0) target = $region33
    $region32: #{tpu_custom_call.1} parent=1 // pred_region
      %861 = dma.done [#allocation5], 16
    $region33: #{tpu_custom_call.1} parent=1 // pred_fallthru
      _
    %862 = vsyncpa [#allocation5], 1

</llo_original>
